<compile_context>
chip_gen: v7x
topology: tpu7x:2x2x1
jax: 0.10.0
libtpu: 0.0.40
codegen_flags: <defaults>
</compile_context>

<pallas_src>
import functools

import jax
import jax.numpy as jnp
from jax.experimental import pallas as pl
from jax.experimental.pallas import tpu as pltpu

TM = 128          # row tile (sublane axis); multiple of 8
LN_EPS = 1e-5     # torch.nn.LayerNorm default eps


def _round_up(x, m):
    return (x + m - 1) // m * m


def _row_tile(m):
    """Largest row tile <= TM whose sublane extent is a multiple of 8."""
    return min(TM, _round_up(m, 8))


def _col_tile(n):
    """Lane-dense output tile: whole N when small, else a 128-multiple divisor."""
    if n <= 512:
        return n
    for t in (512, 256, 128):
        if n % t == 0:
            return t
    return n


# ----------------------------------------------------------------------------
# Pallas kernels
# ----------------------------------------------------------------------------
def _ln_kernel(x_ref, g_ref, b_ref, o_ref):
    """LayerNorm over the last (channel) dim for a (tm, C) row tile."""
    x = x_ref[...].astype(jnp.float32)
    mu = jnp.mean(x, axis=-1, keepdims=True)
    xc = x - mu
    var = jnp.mean(xc * xc, axis=-1, keepdims=True)
    y = xc * jax.lax.rsqrt(var + LN_EPS)
    o_ref[...] = (y * g_ref[...] + b_ref[...]).astype(o_ref.dtype)


def _ln_linear_kernel(x_ref, g_ref, b_ref, w_ref, bias_ref, o_ref, *, apply_gelu):
    """Fused PreNorm + Linear: LN (f32) -> bf16 MXU matmul (f32 acc) -> bias -> GELU."""
    x = x_ref[...].astype(jnp.float32)
    mu = jnp.mean(x, axis=-1, keepdims=True)
    xc = x - mu
    var = jnp.mean(xc * xc, axis=-1, keepdims=True)
    y = xc * jax.lax.rsqrt(var + LN_EPS) * g_ref[...] + b_ref[...]
    acc = jnp.dot(y.astype(jnp.bfloat16), w_ref[...],
                  preferred_element_type=jnp.float32)
    acc = acc + bias_ref[...]
    if apply_gelu:
        # tanh-approx GELU (VPU/EUP friendly in-kernel).
        # TODO(synk): switch to exact erf GELU if the wrapped fn requires it.
        acc = jax.nn.gelu(acc, approximate=True)
    o_ref[...] = acc.astype(o_ref.dtype)


def _linear_kernel(x_ref, w_ref, bias_ref, o_ref, *, apply_gelu):
    """Plain Linear (+ bias + GELU) kernel, bf16 MXU operands, f32 accumulate."""
    acc = jnp.dot(x_ref[...].astype(jnp.bfloat16), w_ref[...],
                  preferred_element_type=jnp.float32)
    acc = acc + bias_ref[...]
    if apply_gelu:
        acc = jax.nn.gelu(acc, approximate=True)
    o_ref[...] = acc.astype(o_ref.dtype)


# ----------------------------------------------------------------------------
# Wrappers
# ----------------------------------------------------------------------------
def pallas_layernorm(x, gamma, beta):
    """LayerNorm over the last dim; matches torch.nn.LayerNorm(dim)."""
    shape = x.shape
    C = shape[-1]
    xf = x.reshape(-1, C)
    M = xf.shape[0]
    tm = _row_tile(M)
    out = pl.pallas_call(
        _ln_kernel,
        out_shape=jax.ShapeDtypeStruct((M, C), x.dtype),
        grid=(pl.cdiv(M, tm),),
        in_specs=[pl.BlockSpec((tm, C), lambda i: (i, 0)),
                  pl.BlockSpec((1, C), lambda i: (0, 0)),
                  pl.BlockSpec((1, C), lambda i: (0, 0))],
        out_specs=pl.BlockSpec((tm, C), lambda i: (i, 0)),
        compiler_params=pltpu.CompilerParams(
            dimension_semantics=("parallel",)),
    )(xf,
      gamma.reshape(1, C).astype(jnp.float32),
      beta.reshape(1, C).astype(jnp.float32))
    return out.reshape(shape)


def pallas_prenorm_linear(x, gamma, beta, w, bias, *, apply_gelu=False):
    """fn(LayerNorm(x)) for fn = Linear(C -> N)[+GELU], in a single kernel."""
    shape = x.shape
    C = shape[-1]
    N = w.shape[1]
    xf = x.reshape(-1, C)
    M = xf.shape[0]
    tm = _row_tile(M)
    tn = _col_tile(N)
    bias2 = (jnp.zeros((1, N), jnp.float32) if bias is None
             else bias.reshape(1, N).astype(jnp.float32))
    out = pl.pallas_call(
        functools.partial(_ln_linear_kernel, apply_gelu=apply_gelu),
        out_shape=jax.ShapeDtypeStruct((M, N), x.dtype),
        grid=(pl.cdiv(M, tm), pl.cdiv(N, tn)),
        in_specs=[pl.BlockSpec((tm, C), lambda i, j: (i, 0)),
                  pl.BlockSpec((1, C), lambda i, j: (0, 0)),
                  pl.BlockSpec((1, C), lambda i, j: (0, 0)),
                  pl.BlockSpec((C, tn), lambda i, j: (0, j)),
                  pl.BlockSpec((1, tn), lambda i, j: (0, j))],
        out_specs=pl.BlockSpec((tm, tn), lambda i, j: (i, j)),
        compiler_params=pltpu.CompilerParams(
            dimension_semantics=("parallel", "parallel")),
    )(xf,
      gamma.reshape(1, C).astype(jnp.float32),
      beta.reshape(1, C).astype(jnp.float32),
      w.astype(jnp.bfloat16),
      bias2)
    return out.reshape(shape[:-1] + (N,))


def pallas_linear(x, w, bias, *, apply_gelu=False):
    """x @ w + bias (+ GELU); w stored (Cin, Cout) (i.e. torch weight.T)."""
    shape = x.shape
    C = shape[-1]
    N = w.shape[1]
    xf = x.reshape(-1, C)
    M = xf.shape[0]
    tm = _row_tile(M)
    tn = _col_tile(N)
    bias2 = (jnp.zeros((1, N), jnp.float32) if bias is None
             else bias.reshape(1, N).astype(jnp.float32))
    out = pl.pallas_call(
        functools.partial(_linear_kernel, apply_gelu=apply_gelu),
        out_shape=jax.ShapeDtypeStruct((M, N), x.dtype),
        grid=(pl.cdiv(M, tm), pl.cdiv(N, tn)),
        in_specs=[pl.BlockSpec((tm, C), lambda i, j: (i, 0)),
                  pl.BlockSpec((C, tn), lambda i, j: (0, j)),
                  pl.BlockSpec((1, tn), lambda i, j: (0, j))],
        out_specs=pl.BlockSpec((tm, tn), lambda i, j: (i, j)),
        compiler_params=pltpu.CompilerParams(
            dimension_semantics=("parallel", "parallel")),
    )(xf, w.astype(jnp.bfloat16), bias2)
    return out.reshape(shape[:-1] + (N,))


# ----------------------------------------------------------------------------
# Module mirrors
# ----------------------------------------------------------------------------
class Linear:
    """Linear projection (the usual first op of the fn wrapped by PreNorm)."""

    def __init__(self, w, b=None, gelu=False):
        self.w, self.b, self.gelu = w, b, gelu

    def __call__(self, x):
        return pallas_linear(x, self.w, self.b, apply_gelu=self.gelu)


class PreNorm:
    """PreNorm(dim, fn): forward(x, *a, **kw) = fn(LayerNorm(dim)(x), *a, **kw)."""

    def __init__(self, dim, fn, gamma=None, beta=None):
        self.dim = dim
        self.fn = fn
        self.gamma = jnp.ones((dim,), jnp.float32) if gamma is None else gamma
        self.beta = jnp.zeros((dim,), jnp.float32) if beta is None else beta

    def __call__(self, x, *args, **kwargs):
        if isinstance(self.fn, Linear) and not args and not kwargs:
            # Fast path: LN + matmul + bias + activation fused into one kernel.
            return pallas_prenorm_linear(x, self.gamma, self.beta,
                                         self.fn.w, self.fn.b,
                                         apply_gelu=self.fn.gelu)
        # Generic path: Pallas LayerNorm, then the arbitrary wrapped fn (plain JAX).
        return self.fn(pallas_layernorm(x, self.gamma, self.beta), *args, **kwargs)


# ----------------------------------------------------------------------------
# Pure-JAX references for validation
# ----------------------------------------------------------------------------
def _ln_ref(x, gamma, beta):
    xf = x.astype(jnp.float32)
    mu = jnp.mean(xf, axis=-1, keepdims=True)
    xc = xf - mu
    var = jnp.mean(xc * xc, axis=-1, keepdims=True)
    return xc * jax.lax.rsqrt(var + LN_EPS) * gamma + beta


def _prenorm_linear_ref(x, gamma, beta, w, bias):
    y = _ln_ref(x, gamma, beta)
    C, N = w.shape
    out = jnp.dot(y.reshape(-1, C).astype(jnp.bfloat16),
                  w.astype(jnp.bfloat16),
                  preferred_element_type=jnp.float32) + bias
    out = jax.nn.gelu(out, approximate=True)
    return out.reshape(x.shape[:-1] + (N,))


# ----------------------------------------------------------------------------
if __name__ == "__main__":
    key = jax.random.PRNGKey(0)
    k_x, k_x2, k_g, k_b, k_w, k_bias = jax.random.split(key, 6)

    # NHWC feature map; LayerNorm over the channel (last) dim, as in RPA's PreNorm.
    B, H, W, C, Cout = 2, 16, 16, 32, 128
    x = jax.random.normal(k_x, (B, H, W, C), jnp.float32)
    gamma = 1.0 + 0.1 * jax.random.normal(k_g, (C,), jnp.float32)
    beta = 0.1 * jax.random.normal(k_b, (C,), jnp.float32)
    w = jax.random.normal(k_w, (C, Cout), jnp.float32) / jnp.sqrt(C)
    bias = 0.1 * jax.random.normal(k_bias, (Cout,), jnp.float32)

    # --- 1) Fused path: PreNorm(dim, Linear(+GELU)) -> single Pallas kernel ----
    block = PreNorm(C, Linear(w, bias, gelu=True), gamma, beta)
    fused_fwd = jax.jit(lambda t: block(t))
    out = jax.block_until_ready(fused_fwd(x))
    assert out.shape == (B, H, W, Cout), out.shape
    assert bool(jnp.all(jnp.isfinite(out)))
    ref = _prenorm_linear_ref(x, gamma, beta, w, bias)
    assert bool(jnp.allclose(out, ref, rtol=1e-2, atol=1e-2)), \
        float(jnp.max(jnp.abs(out - ref)))

    # Cross-check fused vs unfused (LN kernel then Linear kernel).
    unfused_fwd = jax.jit(
        lambda t: Linear(w, bias, gelu=True)(pallas_layernorm(t, gamma, beta)))
    out_unfused = jax.block_until_ready(unfused_fwd(x))
    assert bool(jnp.allclose(out, out_unfused, rtol=2e-2, atol=2e-2))

    # --- 2) Generic path: arbitrary fn + a row count that is NOT a tile multiple
    #        (exercises the masked partial last block: 2*200 = 400 rows). --------
    x2 = jax.random.normal(k_x2, (B, 200, C), jnp.float32)
    arbitrary_fn = lambda t: jnp.tanh(t) * 0.5
    block2 = PreNorm(C, arbitrary_fn, gamma, beta)
    generic_fwd = jax.jit(lambda t: block2(t))
    out2 = jax.block_until_ready(generic_fwd(x2))
    assert out2.shape == x2.shape, out2.shape
    ref2 = arbitrary_fn(_ln_ref(x2, gamma, beta))
    assert bool(jnp.allclose(out2, ref2, rtol=1e-4, atol=1e-4)), \
        float(jnp.max(jnp.abs(out2 - ref2)))

    print("KERNEL_OK")
</pallas_src>

<mosaic_0001>
module attributes {stable_mosaic.version = 11 : i64} {
  func.func @_ln_linear_kernel(%arg0: i32, %arg1: i32, %arg2: memref<128x32xf32, #tpu.memory_space<vmem>>, %arg3: memref<1x32xf32, #tpu.memory_space<vmem>>, %arg4: memref<1x32xf32, #tpu.memory_space<vmem>>, %arg5: memref<32x128xbf16, #tpu.memory_space<vmem>>, %arg6: memref<1x128xf32, #tpu.memory_space<vmem>>, %arg7: memref<128x128xf32, #tpu.memory_space<vmem>>) attributes {dimension_semantics = [#tpu.dimension_semantics<parallel>, #tpu.dimension_semantics<parallel>], iteration_bounds = array<i64: 4, 1>, scalar_prefetch = 0 : i64, scratch_operands = 0 : i64, tpu.core_type = #tpu.core_type<tc>, window_params = [{transform_indices = @transform_0, window_bounds = array<i64: 128, 32>}, {pipeline_mode = #tpu.pipeline_mode<synchronous>, transform_indices = @transform_1, window_bounds = array<i64: 1, 32>}, {pipeline_mode = #tpu.pipeline_mode<synchronous>, transform_indices = @transform_2, window_bounds = array<i64: 1, 32>}, {transform_indices = @transform_3, window_bounds = array<i64: 32, 128>}, {transform_indices = @transform_4, window_bounds = array<i64: 1, 128>}, {transform_indices = @transform_5, window_bounds = array<i64: 128, 128>}]} {
    %c0 = arith.constant 0 : index
    %c0_0 = arith.constant 0 : index
    %0 = vector.load %arg2[%c0, %c0_0] : memref<128x32xf32, #tpu.memory_space<vmem>>, vector<128x32xf32>
    %cst = arith.constant dense<0.000000e+00> : vector<128xf32>
    %1 = vector.multi_reduction <add>, %0, %cst [1] : vector<128x32xf32> to vector<128xf32>
    %2 = vector.shape_cast %1 : vector<128xf32> to vector<128x1xf32>
    %cst_1 = arith.constant 3.200000e+01 : f32
    %3 = vector.broadcast %cst_1 : f32 to vector<128x1xf32>
    %4 = arith.divf %2, %3 : vector<128x1xf32>
    %5 = vector.broadcast %4 : vector<128x1xf32> to vector<128x32xf32>
    %6 = arith.subf %0, %5 : vector<128x32xf32>
    %7 = arith.mulf %6, %6 : vector<128x32xf32>
    %cst_2 = arith.constant dense<0.000000e+00> : vector<128xf32>
    %8 = vector.multi_reduction <add>, %7, %cst_2 [1] : vector<128x32xf32> to vector<128xf32>
    %9 = vector.shape_cast %8 : vector<128xf32> to vector<128x1xf32>
    %cst_3 = arith.constant 3.200000e+01 : f32
    %10 = vector.broadcast %cst_3 : f32 to vector<128x1xf32>
    %11 = arith.divf %9, %10 : vector<128x1xf32>
    %cst_4 = arith.constant 9.99999974E-6 : f32
    %12 = vector.broadcast %cst_4 : f32 to vector<128x1xf32>
    %13 = arith.addf %11, %12 : vector<128x1xf32>
    %14 = math.rsqrt %13 : vector<128x1xf32>
    %15 = vector.broadcast %14 : vector<128x1xf32> to vector<128x32xf32>
    %16 = arith.mulf %6, %15 : vector<128x32xf32>
    %c0_5 = arith.constant 0 : index
    %c0_6 = arith.constant 0 : index
    %17 = vector.load %arg3[%c0_5, %c0_6] : memref<1x32xf32, #tpu.memory_space<vmem>>, vector<1x32xf32>
    %18 = vector.broadcast %17 : vector<1x32xf32> to vector<128x32xf32>
    %19 = arith.mulf %16, %18 : vector<128x32xf32>
    %c0_7 = arith.constant 0 : index
    %c0_8 = arith.constant 0 : index
    %20 = vector.load %arg4[%c0_7, %c0_8] : memref<1x32xf32, #tpu.memory_space<vmem>>, vector<1x32xf32>
    %21 = vector.broadcast %20 : vector<1x32xf32> to vector<128x32xf32>
    %22 = arith.addf %19, %21 : vector<128x32xf32>
    %23 = arith.truncf %22 : vector<128x32xf32> to vector<128x32xbf16>
    %c0_9 = arith.constant 0 : index
    %c0_10 = arith.constant 0 : index
    %24 = vector.load %arg5[%c0_9, %c0_10] : memref<32x128xbf16, #tpu.memory_space<vmem>>, vector<32x128xbf16>
    %cst_11 = arith.constant dense<0.000000e+00> : vector<128x128xf32>
    %25 = tpu.matmul %23, %24, %cst_11 {dimension_numbers = #tpu.dot_dimension_numbers<[1], [0], [0], [1], [0, 0, 1, 1], [], []>} : vector<128x32xbf16>, vector<32x128xbf16>, vector<128x128xf32> -> vector<128x128xf32>
    %c0_12 = arith.constant 0 : index
    %c0_13 = arith.constant 0 : index
    %26 = vector.load %arg6[%c0_12, %c0_13] : memref<1x128xf32, #tpu.memory_space<vmem>>, vector<1x128xf32>
    %27 = vector.broadcast %26 : vector<1x128xf32> to vector<128x128xf32>
    %28 = arith.addf %25, %27 : vector<128x128xf32>
    %29 = arith.mulf %28, %28 : vector<128x128xf32>
    %30 = arith.mulf %28, %29 : vector<128x128xf32>
    %cst_14 = arith.constant 4.471500e-02 : f32
    %31 = vector.broadcast %cst_14 : f32 to vector<128x128xf32>
    %32 = arith.mulf %31, %30 : vector<128x128xf32>
    %33 = arith.addf %28, %32 : vector<128x128xf32>
    %cst_15 = arith.constant 0.797884583 : f32
    %34 = vector.broadcast %cst_15 : f32 to vector<128x128xf32>
    %35 = arith.mulf %34, %33 : vector<128x128xf32>
    %36 = math.tanh %35 : vector<128x128xf32>
    %cst_16 = arith.constant 1.000000e+00 : f32
    %37 = vector.broadcast %cst_16 : f32 to vector<128x128xf32>
    %38 = arith.addf %37, %36 : vector<128x128xf32>
    %cst_17 = arith.constant 5.000000e-01 : f32
    %39 = vector.broadcast %cst_17 : f32 to vector<128x128xf32>
    %40 = arith.mulf %39, %38 : vector<128x128xf32>
    %41 = arith.mulf %28, %40 : vector<128x128xf32>
    %c0_18 = arith.constant 0 : index
    %c0_19 = arith.constant 0 : index
    %42 = vector.load %arg7[%c0_18, %c0_19] : memref<128x128xf32, #tpu.memory_space<vmem>>, vector<128x128xf32>
    tpu.vector_store %arg7[%c0_18, %c0_19], %41 {strides = array<i32>} : memref<128x128xf32, #tpu.memory_space<vmem>>, vector<128x128xf32>,
    return
  }
  func.func @transform_0(%arg0: i32, %arg1: i32) -> (i32, i32) {
    %c0_i32 = arith.constant 0 : i32
    %c0_i32_0 = arith.constant 0 : i32
    return %arg0, %c0_i32 : i32, i32
  }
  func.func @transform_1(%arg0: i32, %arg1: i32) -> (i32, i32) {
    %c0_i32 = arith.constant 0 : i32
    %c0_i32_0 = arith.constant 0 : i32
    %c0_i32_1 = arith.constant 0 : i32
    return %c0_i32, %c0_i32_0 : i32, i32
  }
  func.func @transform_2(%arg0: i32, %arg1: i32) -> (i32, i32) {
    %c0_i32 = arith.constant 0 : i32
    %c0_i32_0 = arith.constant 0 : i32
    %c0_i32_1 = arith.constant 0 : i32
    return %c0_i32, %c0_i32_0 : i32, i32
  }
  func.func @transform_3(%arg0: i32, %arg1: i32) -> (i32, i32) {
    %c0_i32 = arith.constant 0 : i32
    %c0_i32_0 = arith.constant 0 : i32
    return %c0_i32, %arg1 : i32, i32
  }
  func.func @transform_4(%arg0: i32, %arg1: i32) -> (i32, i32) {
    %c0_i32 = arith.constant 0 : i32
    %c0_i32_0 = arith.constant 0 : i32
    return %c0_i32, %arg1 : i32, i32
  }
  func.func @transform_5(%arg0: i32, %arg1: i32) -> (i32, i32) {
    %c0_i32 = arith.constant 0 : i32
    return %arg0, %arg1 : i32, i32
  }
}

</mosaic_0001>

<llo_original>
// kernel: _lambda_.1
$region0: #{_lambda_.1}
  #allocation0 [shape = 'u32[]', space=smem, size = 0x4, offset = 0x4, fixed_abs, tag = 'smem constant byte address 0x4 - core index']
  #allocation1 [shape = 'u32[144,128]{1,0:T(1,128)}', space=vmem, size = 0x12000, scoped, tag = 'internal scratch']
  %s0 = inlined_call_operand.hbm [shape: f32[512,32], index: 0, kind: input, shape index: {}]
  %s1 = inlined_call_operand.vmem [shape: f32[1,32], index: 1, kind: input, shape index: {}]
  %s2 = inlined_call_operand.vmem [shape: f32[1,32], index: 2, kind: input, shape index: {}]
  %s3 = inlined_call_operand.vmem [shape: bf16[32,128], index: 3, kind: input, shape index: {}]
  %s4 = inlined_call_operand.vmem [shape: f32[1,128], index: 4, kind: input, shape index: {}]
  %s5 = inlined_call_operand.hbm [shape: f32[512,128], index: 5, kind: output, shape index: {}]
  %s6 = sld [smem:[#allocation0]]
  $region57: #{_lambda_.1} parent=0
    _
  %s8 = ssub.s32 1, %s6
  %s9 = scalar_select 0, %s8, %s6
  $region1: #{_lambda_.1} parent=0
    #allocation2 [shape = 'u8[131072]{0}', space=vmem, size = 0x20000, scoped, tag = 'input window, operand 0']
    #allocation3 [shape = 's32[2]{0}', space=sflag, size = 0x8, scoped, tag = 'scoped memory for _lambda_.1']
    #allocation4 [shape = 's32[2]{0}', space=sflag, size = 0x8, scoped, tag = 'scoped memory for _lambda_.1']
    #allocation5 [shape = 'u8[131072]{0}', space=vmem, size = 0x20000, scoped, tag = 'output window, operand 0']
    %10 = vsyncpa [#allocation3], 0
    %s11 = scalar_lea.sflag [#allocation3], 1
    %12 = vsyncpa %s11, 0
    %13 = vsyncpa [#allocation4], 0
    %s14 = scalar_lea.sflag [#allocation4], 1
    %15 = vsyncpa %s14, 0
    loop: start=0, step=1, limit=6
    $region2: #{_lambda_.1} parent=1 // loop_pre_header
      _
    $region3: #{_lambda_.1} parent=1 // loop_header
      %s17 = sphi 0, %s21
      %p18 = scmp.ge.s32.totalorder %s17, 6
      %s24 = sphi 0, %s36
      %s25 = sphi 0, %s32
      %s26 = sphi 0, %s24
      %s27 = sphi 0, %s25
      %s28 = sphi 0, %s26
      %s29 = sphi 0, %s27
      %s39 = sphi 0, %s41
      %s42 = sphi 0, %s39
      %s43 = sphi 0, %s42
      %s59 = sphi 0, %s43
      %s63 = sphi 0, %s63
      %s65 = sphi 0, %s63
      %s66 = sphi 0, %s65
      %s80 = sphi 0, %s66
      %s84 = sphi 0, %s84
      %s86 = sphi 0, %s84
      %s87 = sphi 0, %s86
      %s101 = sphi 0, %s87
      %s107 = sphi 0, %s109
      %s110 = sphi 0, %s107
      %s111 = sphi 0, %s110
      %s127 = sphi 0, %s111
      %s133 = sphi 0, %s135
      %s136 = sphi 0, %s133
      %s137 = sphi 0, %s136
      %s153 = sphi 0, %s137
      %s161 = sphi 0, %s163
      %s164 = sphi 0, %s161
      %s165 = sphi 0, %s164
      %s181 = sphi 0, %s165
    $region4: #{_lambda_.1} parent=1 // loop_header_branch
      %20 = sbr.rel (%p18) target = $region8
    $region5: #{_lambda_.1} parent=1 // loop_body
      %s22 = ssub.s32 %s17, 1
      %s23 = ssub.s32 %s17, 2
      %s30 = sadd.s32 1, %s25
      %p31 = scmp.ge.s32.totalorder %s30, 1
      %s32 = scalar_select %p31, 0, %s30
      %s33 = sadd.s32 1, %s24
      %s34 = scalar_select %p31, %s33, %s24
      %p35 = scmp.ge.s32.totalorder %s34, 4
      %s36 = scalar_select %p35, 0, %s34
      %s37 = ssub.s32 %s24, %s36
      %p38 = scmp.eq.s32.totalorder %s37, 0
      %s40 = sadd.s32 %s39, 1
      %s41 = scalar_select %p38, %s39, %s40
      %p44 = pneg %p38
      %p45 = scmp.eq.s32.totalorder %s17, 3
      %p46 = por %p44, %p45
      %p47 = scmp.ne.s32.totalorder %s39, %s42
      %p48 = scmp.eq.s32.totalorder %s17, 0
      %p49 = por %p47, %p48
      %p50 = scmp.ne.s32.totalorder %s39, %s42
      %p51 = scmp.eq.s32.totalorder %s22, 3
      %p52 = por %p50, %p51
      %p53 = scmp.ne.s32.totalorder %s42, %s43
      %p54 = scmp.eq.s32.totalorder %s22, 0
      %p55 = por %p53, %p54
      %p56 = scmp.ne.s32.totalorder %s42, %s43
      %p57 = scmp.eq.s32.totalorder %s23, 3
      %p58 = por %p56, %p57
      %p60 = scmp.ne.s32.totalorder %s43, %s59
      %p61 = scmp.eq.s32.totalorder %s23, 0
      %p62 = por %p60, %p61
      %s64 = sadd.s32 %s63, 1
      %p67 = scmp.eq.s32.totalorder %s17, 3
      %p68 = scmp.ne.s32.totalorder %s63, %s65
      %p69 = scmp.eq.s32.totalorder %s17, 0
      %p70 = por %p68, %p69
      %p71 = scmp.ne.s32.totalorder %s63, %s65
      %p72 = scmp.eq.s32.totalorder %s22, 3
      %p73 = por %p71, %p72
      %p74 = scmp.ne.s32.totalorder %s65, %s66
      %p75 = scmp.eq.s32.totalorder %s22, 0
      %p76 = por %p74, %p75
      %p77 = scmp.ne.s32.totalorder %s65, %s66
      %p78 = scmp.eq.s32.totalorder %s23, 3
      %p79 = por %p77, %p78
      %p81 = scmp.ne.s32.totalorder %s66, %s80
      %p82 = scmp.eq.s32.totalorder %s23, 0
      %p83 = por %p81, %p82
      %s85 = sadd.s32 %s84, 1
      %p88 = scmp.eq.s32.totalorder %s17, 3
      %p89 = scmp.ne.s32.totalorder %s84, %s86
      %p90 = scmp.eq.s32.totalorder %s17, 0
      %p91 = por %p89, %p90
      %p92 = scmp.ne.s32.totalorder %s84, %s86
      %p93 = scmp.eq.s32.totalorder %s22, 3
      %p94 = por %p92, %p93
      %p95 = scmp.ne.s32.totalorder %s86, %s87
      %p96 = scmp.eq.s32.totalorder %s22, 0
      %p97 = por %p95, %p96
      %p98 = scmp.ne.s32.totalorder %s86, %s87
      %p99 = scmp.eq.s32.totalorder %s23, 3
      %p100 = por %p98, %p99
      %p102 = scmp.ne.s32.totalorder %s87, %s101
      %p103 = scmp.eq.s32.totalorder %s23, 0
      %p104 = por %p102, %p103
      %s105 = ssub.s32 %s25, %s32
      %p106 = scmp.eq.s32.totalorder %s105, 0
      %s108 = sadd.s32 %s107, 1
      %s109 = scalar_select %p106, %s107, %s108
      %p112 = pneg %p106
      %p113 = scmp.eq.s32.totalorder %s17, 3
      %p114 = por %p112, %p113
      %p115 = scmp.ne.s32.totalorder %s107, %s110
      %p116 = scmp.eq.s32.totalorder %s17, 0
      %p117 = por %p115, %p116
      %p118 = scmp.ne.s32.totalorder %s107, %s110
      %p119 = scmp.eq.s32.totalorder %s22, 3
      %p120 = por %p118, %p119
      %p121 = scmp.ne.s32.totalorder %s110, %s111
      %p122 = scmp.eq.s32.totalorder %s22, 0
      %p123 = por %p121, %p122
      %p124 = scmp.ne.s32.totalorder %s110, %s111
      %p125 = scmp.eq.s32.totalorder %s23, 3
      %p126 = por %p124, %p125
      %p128 = scmp.ne.s32.totalorder %s111, %s127
      %p129 = scmp.eq.s32.totalorder %s23, 0
      %p130 = por %p128, %p129
      %s131 = ssub.s32 %s25, %s32
      %p132 = scmp.eq.s32.totalorder %s131, 0
      %s134 = sadd.s32 %s133, 1
      %s135 = scalar_select %p132, %s133, %s134
      %p138 = pneg %p132
      %p139 = scmp.eq.s32.totalorder %s17, 3
      %p140 = por %p138, %p139
      %p141 = scmp.ne.s32.totalorder %s133, %s136
      %p142 = scmp.eq.s32.totalorder %s17, 0
      %p143 = por %p141, %p142
      %p144 = scmp.ne.s32.totalorder %s133, %s136
      %p145 = scmp.eq.s32.totalorder %s22, 3
      %p146 = por %p144, %p145
      %p147 = scmp.ne.s32.totalorder %s136, %s137
      %p148 = scmp.eq.s32.totalorder %s22, 0
      %p149 = por %p147, %p148
      %p150 = scmp.ne.s32.totalorder %s136, %s137
      %p151 = scmp.eq.s32.totalorder %s23, 3
      %p152 = por %p150, %p151
      %p154 = scmp.ne.s32.totalorder %s137, %s153
      %p155 = scmp.eq.s32.totalorder %s23, 0
      %p156 = por %p154, %p155
      %s157 = ssub.s32 %s24, %s36
      %s158 = ssub.s32 %s25, %s32
      %s159 = sor.u32 %s157, %s158
      %p160 = scmp.eq.s32.totalorder %s159, 0
      %s162 = sadd.s32 %s161, 1
      %s163 = scalar_select %p160, %s161, %s162
      %p166 = pneg %p160
      %p167 = scmp.eq.s32.totalorder %s17, 3
      %p168 = por %p166, %p167
      %p169 = scmp.ne.s32.totalorder %s161, %s164
      %p170 = scmp.eq.s32.totalorder %s17, 0
      %p171 = por %p169, %p170
      %p172 = scmp.ne.s32.totalorder %s161, %s164
      %p173 = scmp.eq.s32.totalorder %s22, 3
      %p174 = por %p172, %p173
      %p175 = scmp.ne.s32.totalorder %s164, %s165
      %p176 = scmp.eq.s32.totalorder %s22, 0
      %p177 = por %p175, %p176
      %p178 = scmp.ne.s32.totalorder %s164, %s165
      %p179 = scmp.eq.s32.totalorder %s23, 3
      %p180 = por %p178, %p179
      %p182 = scmp.ne.s32.totalorder %s165, %s181
      %p183 = scmp.eq.s32.totalorder %s23, 0
      %p184 = por %p182, %p183
      %p185 = scmp.le.s32.totalorder 1, %s17
      %p186 = scmp.lt.s32.totalorder %s17, 5
      %p187 = pnand %p185, %p186
      %p188 = pneg %p187
      // Predicated region
      $region9: #{_lambda_.1} parent=5 // pred_check
        _
      $region10: #{_lambda_.1} parent=5 // pred_check_branch
        %190 = sbr.rel (%p187) target = $region12
      $region11: #{_lambda_.1} parent=5 // pred_region
        %s191 = ssub.s32 %s17, 1
        // Predicated region
        $region13: #{_lambda_.1} parent=11 // pred_check
          %p192 = pneg %p76
        $region14: #{_lambda_.1} parent=11 // pred_check_branch
          %194 = sbr.rel (%p192) target = $region16
        $region15: #{_lambda_.1} parent=11 // pred_region
          _
        $region16: #{_lambda_.1} parent=11 // pred_fallthru
          _
        // Predicated region
        $region17: #{_lambda_.1} parent=11 // pred_check
          %p195 = pneg %p97
        $region18: #{_lambda_.1} parent=11 // pred_check_branch
          %197 = sbr.rel (%p195) target = $region20
        $region19: #{_lambda_.1} parent=11 // pred_region
          _
        $region20: #{_lambda_.1} parent=11 // pred_fallthru
          _
        // Predicated region
        $region21: #{_lambda_.1} parent=11 // pred_check
          %p198 = pneg %p123
        $region22: #{_lambda_.1} parent=11 // pred_check_branch
          %200 = sbr.rel (%p198) target = $region24
        $region23: #{_lambda_.1} parent=11 // pred_region
          %p201 = scmp.lt.s32.totalorder %s27, 0
          %s202 = scalar_select %p201, %s27, 0
          %s203 = smul.addr %s202, 4
          %s204 = scalar_lea.vmem %s3, %s203
        $region24: #{_lambda_.1} parent=11 // pred_fallthru
          _
        // Predicated region
        $region25: #{_lambda_.1} parent=11 // pred_check
          %p205 = pneg %p149
        $region26: #{_lambda_.1} parent=11 // pred_check_branch
          %207 = sbr.rel (%p205) target = $region28
        $region27: #{_lambda_.1} parent=11 // pred_region
          %p208 = scmp.lt.s32.totalorder %s27, 0
          %s209 = scalar_select %p208, %s27, 0
          %s210 = scalar_lea.vmem %s4, %s209
        $region28: #{_lambda_.1} parent=11 // pred_fallthru
          _
      $region12: #{_lambda_.1} parent=5 // pred_fallthru
        _
      %p211 = scmp.lt.s32.totalorder %s17, 4
      // Predicated region
      $region29: #{_lambda_.1} parent=5 // pred_check
        %p212 = pneg %p211
      $region30: #{_lambda_.1} parent=5 // pred_check_branch
        %214 = sbr.rel (%p212) target = $region32
      $region31: #{_lambda_.1} parent=5 // pred_region
        // Predicated region
        $region33: #{_lambda_.1} parent=31 // pred_check
          %p215 = pneg %p49
        $region34: #{_lambda_.1} parent=31 // pred_check_branch
          %217 = sbr.rel (%p215) target = $region36
        $region35: #{_lambda_.1} parent=31 // pred_region
          %s218 = sand.u32 %s39, 1
          %s219 = scalar_lea.sflag [#allocation3], %s218
          %s220 = sand.u32 %s39, 1
          %s221 = smul.addr %s220, 128
          %s222 = scalar_lea.vmem [#allocation2], %s221
          %s223 = smul.u32 16, %s24
          %s225 = ssub.s32 2048, 2048
          %226 = vsyncadd %s219, %s225
          %s227 = smul.addr %s223, 128
          %s228 = scalar_lea.hbm %s0, %s227
          %s229 = sshll.u32 %s222, 4
          %s230 = int_to_ptr.vmem [resolvable:$true] %s229
          %235 = dma.hbm_to_vmem [thread:$0]  %s228, 2048, %s230, %s219, 128, 128, 8
        $region36: #{_lambda_.1} parent=31 // pred_fallthru
          _
      $region32: #{_lambda_.1} parent=5 // pred_fallthru
        _
      %p236 = scmp.le.s32.totalorder 1, %s17
      %p237 = scmp.lt.s32.totalorder %s17, 5
      %p238 = pnand %p236, %p237
      %p239 = pneg %p238
      // Predicated region
      $region37: #{_lambda_.1} parent=5 // pred_check
        _
      $region38: #{_lambda_.1} parent=5 // pred_check_branch
        %241 = sbr.rel (%p238) target = $region40
      $region39: #{_lambda_.1} parent=5 // pred_region
        %s242 = ssub.s32 %s17, 1
        %s243 = sand.u32 %s42, 1
        %s244 = scalar_lea.sflag [#allocation3], %s243
        %s245 = sand.u32 %s42, 1
        %s246 = smul.addr %s245, 128
        %s247 = scalar_lea.vmem [#allocation2], %s246
        // Predicated region
        $region41: #{_lambda_.1} parent=39 // pred_check
          %p248 = pneg %p55
        $region42: #{_lambda_.1} parent=39 // pred_check_branch
          %250 = sbr.rel (%p248) target = $region44
        $region43: #{_lambda_.1} parent=39 // pred_region
          %251 = dma.done %s244, 2048
        $region44: #{_lambda_.1} parent=39 // pred_fallthru
          _
        %s252 = sand.u32 %s42, 1
        %s253 = scalar_lea.sflag [#allocation3], %s252
        %s254 = sand.u32 %s42, 1
        %s255 = smul.addr %s254, 128
        %s256 = scalar_lea.vmem [#allocation2], %s255
        %p257 = pneg %p55
        %p258 = pneg %p52
        %p259 = pneg %p76
        %p260 = pneg %p73
        %p261 = pneg %p97
        %p262 = pneg %p94
        %p263 = scmp.lt.s32.totalorder %s27, 0
        %s264 = scalar_select %p263, %s27, 0
        %s265 = smul.addr %s264, 4
        %s266 = scalar_lea.vmem %s3, %s265
        %p267 = pneg %p123
        %p268 = pneg %p120
        %p269 = scmp.lt.s32.totalorder %s27, 0
        %s270 = scalar_select %p269, %s27, 0
        %s271 = scalar_lea.vmem %s4, %s270
        %p272 = pneg %p149
        %p273 = pneg %p146
        %p274 = pneg %p177
        %p275 = pneg %p174
        %s276 = sand.u32 %s164, 1
        %s277 = scalar_lea.sflag [#allocation4], %s276
        %s278 = sand.u32 %s164, 1
        %s279 = smul.addr %s278, 128
        %s280 = scalar_lea.vmem [#allocation5], %s279
        %s281 = smul.u32 16, %s26
        %p282 = scmp.lt.s32.totalorder %s27, 0
        %s283 = scalar_select %p282, %s27, 0
        %s284 = smul.addr %s283, 4
        %s285 = scalar_lea.vmem %s3, %s284
        %p286 = scmp.lt.s32.totalorder %s27, 0
        %s287 = scalar_select %p286, %s27, 0
        %s288 = scalar_lea.vmem %s4, %s287
        %s289 = smul.u32 16, %s26
        %v291 = vld [vmem:[%s247] sm:$0xff]
        %v292 = vld [vmem:[%s247 + $0x8] sm:$0xff]
        %v293 = vld [vmem:[%s247 + $0x10] sm:$0xff]
        %v294 = vld [vmem:[%s247 + $0x18] sm:$0xff]
        %v295 = vld [vmem:[%s247 + $0x20] sm:$0xff]
        %v296 = vld [vmem:[%s247 + $0x28] sm:$0xff]
        %v297 = vld [vmem:[%s247 + $0x30] sm:$0xff]
        %v298 = vld [vmem:[%s247 + $0x38] sm:$0xff]
        %v299 = vld [vmem:[%s247 + $0x40] sm:$0xff]
        %v300 = vld [vmem:[%s247 + $0x48] sm:$0xff]
        %v301 = vld [vmem:[%s247 + $0x50] sm:$0xff]
        %v302 = vld [vmem:[%s247 + $0x58] sm:$0xff]
        %v303 = vld [vmem:[%s247 + $0x60] sm:$0xff]
        %v304 = vld [vmem:[%s247 + $0x68] sm:$0xff]
        %v305 = vld [vmem:[%s247 + $0x70] sm:$0xff]
        %v306 = vld [vmem:[%s247 + $0x78] sm:$0xff]
        %vm307 = vcmask 261120
        %v308 = vsel %vm307, %v291, 0.0
        %309 = vadd.xlane.f32.xlu0 %v308
        %v310 = vpop.xlane.xlu0 %309
        %v311 = vsel %vm307, %v292, 0.0
        %312 = vadd.xlane.f32.xlu0 %v311
        %v313 = vpop.xlane.xlu0 %312
        %v314 = vsel %vm307, %v293, 0.0
        %315 = vadd.xlane.f32.xlu0 %v314
        %v316 = vpop.xlane.xlu0 %315
        %v317 = vsel %vm307, %v294, 0.0
        %318 = vadd.xlane.f32.xlu0 %v317
        %v319 = vpop.xlane.xlu0 %318
        %v320 = vsel %vm307, %v295, 0.0
        %321 = vadd.xlane.f32.xlu0 %v320
        %v322 = vpop.xlane.xlu0 %321
        %v323 = vsel %vm307, %v296, 0.0
        %324 = vadd.xlane.f32.xlu0 %v323
        %v325 = vpop.xlane.xlu0 %324
        %v326 = vsel %vm307, %v297, 0.0
        %327 = vadd.xlane.f32.xlu0 %v326
        %v328 = vpop.xlane.xlu0 %327
        %v329 = vsel %vm307, %v298, 0.0
        %330 = vadd.xlane.f32.xlu0 %v329
        %v331 = vpop.xlane.xlu0 %330
        %v332 = vsel %vm307, %v299, 0.0
        %333 = vadd.xlane.f32.xlu0 %v332
        %v334 = vpop.xlane.xlu0 %333
        %v335 = vsel %vm307, %v300, 0.0
        %336 = vadd.xlane.f32.xlu0 %v335
        %v337 = vpop.xlane.xlu0 %336
        %v338 = vsel %vm307, %v301, 0.0
        %339 = vadd.xlane.f32.xlu0 %v338
        %v340 = vpop.xlane.xlu0 %339
        %v341 = vsel %vm307, %v302, 0.0
        %342 = vadd.xlane.f32.xlu0 %v341
        %v343 = vpop.xlane.xlu0 %342
        %v344 = vsel %vm307, %v303, 0.0
        %345 = vadd.xlane.f32.xlu0 %v344
        %v346 = vpop.xlane.xlu0 %345
        %v347 = vsel %vm307, %v304, 0.0
        %348 = vadd.xlane.f32.xlu0 %v347
        %v349 = vpop.xlane.xlu0 %348
        %v350 = vsel %vm307, %v305, 0.0
        %351 = vadd.xlane.f32.xlu0 %v350
        %v352 = vpop.xlane.xlu0 %351
        %v353 = vsel %vm307, %v306, 0.0
        %354 = vadd.xlane.f32.xlu0 %v353
        %v355 = vpop.xlane.xlu0 %354
        %v356 = vrcp.pop 32.0
        %v357 = vmul.f32 %v310, %v356
        %v358 = vmul.f32 %v313, %v356
        %v359 = vmul.f32 %v316, %v356
        %v360 = vmul.f32 %v319, %v356
        %v361 = vmul.f32 %v322, %v356
        %v362 = vmul.f32 %v325, %v356
        %v363 = vmul.f32 %v328, %v356
        %v364 = vmul.f32 %v331, %v356
        %v365 = vmul.f32 %v334, %v356
        %v366 = vmul.f32 %v337, %v356
        %v367 = vmul.f32 %v340, %v356
        %v368 = vmul.f32 %v343, %v356
        %v369 = vmul.f32 %v346, %v356
        %v370 = vmul.f32 %v349, %v356
        %v371 = vmul.f32 %v352, %v356
        %v372 = vmul.f32 %v355, %v356
        %v373 = vsub.f32 %v291, %v357
        %v374 = vsub.f32 %v292, %v358
        %v375 = vsub.f32 %v293, %v359
        %v376 = vsub.f32 %v294, %v360
        %v377 = vsub.f32 %v295, %v361
        %v378 = vsub.f32 %v296, %v362
        %v379 = vsub.f32 %v297, %v363
        %v380 = vsub.f32 %v298, %v364
        %v381 = vsub.f32 %v299, %v365
        %v382 = vsub.f32 %v300, %v366
        %v383 = vsub.f32 %v301, %v367
        %v384 = vsub.f32 %v302, %v368
        %v385 = vsub.f32 %v303, %v369
        %v386 = vsub.f32 %v304, %v370
        %v387 = vsub.f32 %v305, %v371
        %v388 = vsub.f32 %v306, %v372
        %v389 = vmul.f32 %v373, %v373
        %v390 = vmul.f32 %v374, %v374
        %v391 = vmul.f32 %v375, %v375
        %v392 = vmul.f32 %v376, %v376
        %v393 = vmul.f32 %v377, %v377
        %v394 = vmul.f32 %v378, %v378
        %v395 = vmul.f32 %v379, %v379
        %v396 = vmul.f32 %v380, %v380
        %v397 = vmul.f32 %v381, %v381
        %v398 = vmul.f32 %v382, %v382
        %v399 = vmul.f32 %v383, %v383
        %v400 = vmul.f32 %v384, %v384
        %v401 = vmul.f32 %v385, %v385
        %v402 = vmul.f32 %v386, %v386
        %v403 = vmul.f32 %v387, %v387
        %v404 = vmul.f32 %v388, %v388
        %v405 = vsel %vm307, %v389, 0.0
        %406 = vadd.xlane.f32.xlu0 %v405
        %v407 = vpop.xlane.xlu0 %406
        %v408 = vsel %vm307, %v390, 0.0
        %409 = vadd.xlane.f32.xlu0 %v408
        %v410 = vpop.xlane.xlu0 %409
        %v411 = vsel %vm307, %v391, 0.0
        %412 = vadd.xlane.f32.xlu0 %v411
        %v413 = vpop.xlane.xlu0 %412
        %v414 = vsel %vm307, %v392, 0.0
        %415 = vadd.xlane.f32.xlu0 %v414
        %v416 = vpop.xlane.xlu0 %415
        %v417 = vsel %vm307, %v393, 0.0
        %418 = vadd.xlane.f32.xlu0 %v417
        %v419 = vpop.xlane.xlu0 %418
        %v420 = vsel %vm307, %v394, 0.0
        %421 = vadd.xlane.f32.xlu0 %v420
        %v422 = vpop.xlane.xlu0 %421
        %v423 = vsel %vm307, %v395, 0.0
        %424 = vadd.xlane.f32.xlu0 %v423
        %v425 = vpop.xlane.xlu0 %424
        %v426 = vsel %vm307, %v396, 0.0
        %427 = vadd.xlane.f32.xlu0 %v426
        %v428 = vpop.xlane.xlu0 %427
        %v429 = vsel %vm307, %v397, 0.0
        %430 = vadd.xlane.f32.xlu0 %v429
        %v431 = vpop.xlane.xlu0 %430
        %v432 = vsel %vm307, %v398, 0.0
        %433 = vadd.xlane.f32.xlu0 %v432
        %v434 = vpop.xlane.xlu0 %433
        %v435 = vsel %vm307, %v399, 0.0
        %436 = vadd.xlane.f32.xlu0 %v435
        %v437 = vpop.xlane.xlu0 %436
        %v438 = vsel %vm307, %v400, 0.0
        %439 = vadd.xlane.f32.xlu0 %v438
        %v440 = vpop.xlane.xlu0 %439
        %v441 = vsel %vm307, %v401, 0.0
        %442 = vadd.xlane.f32.xlu0 %v441
        %v443 = vpop.xlane.xlu0 %442
        %v444 = vsel %vm307, %v402, 0.0
        %445 = vadd.xlane.f32.xlu0 %v444
        %v446 = vpop.xlane.xlu0 %445
        %v447 = vsel %vm307, %v403, 0.0
        %448 = vadd.xlane.f32.xlu0 %v447
        %v449 = vpop.xlane.xlu0 %448
        %v450 = vsel %vm307, %v404, 0.0
        %451 = vadd.xlane.f32.xlu0 %v450
        %v452 = vpop.xlane.xlu0 %451
        %v453 = vmul.f32 %v407, %v356
        %v454 = vmul.f32 %v410, %v356
        %v455 = vmul.f32 %v413, %v356
        %v456 = vmul.f32 %v416, %v356
        %v457 = vmul.f32 %v419, %v356
        %v458 = vmul.f32 %v422, %v356
        %v459 = vmul.f32 %v425, %v356
        %v460 = vmul.f32 %v428, %v356
        %v461 = vmul.f32 %v431, %v356
        %v462 = vmul.f32 %v434, %v356
        %v463 = vmul.f32 %v437, %v356
        %v464 = vmul.f32 %v440, %v356
        %v465 = vmul.f32 %v443, %v356
        %v466 = vmul.f32 %v446, %v356
        %v467 = vmul.f32 %v449, %v356
        %v468 = vmul.f32 %v452, %v356
        %v469 = vadd.f32 %v453, 1e-05
        %v470 = vadd.f32 %v454, 1e-05
        %v471 = vadd.f32 %v455, 1e-05
        %v472 = vadd.f32 %v456, 1e-05
        %v473 = vadd.f32 %v457, 1e-05
        %v474 = vadd.f32 %v458, 1e-05
        %v475 = vadd.f32 %v459, 1e-05
        %v476 = vadd.f32 %v460, 1e-05
        %v477 = vadd.f32 %v461, 1e-05
        %v478 = vadd.f32 %v462, 1e-05
        %v479 = vadd.f32 %v463, 1e-05
        %v480 = vadd.f32 %v464, 1e-05
        %v481 = vadd.f32 %v465, 1e-05
        %v482 = vadd.f32 %v466, 1e-05
        %v483 = vadd.f32 %v467, 1e-05
        %v484 = vadd.f32 %v468, 1e-05
        %v485 = vrsqrt.pop %v469
        %v486 = vrsqrt.pop %v470
        %v487 = vrsqrt.pop %v471
        %v488 = vrsqrt.pop %v472
        %v489 = vrsqrt.pop %v473
        %v490 = vrsqrt.pop %v474
        %v491 = vrsqrt.pop %v475
        %v492 = vrsqrt.pop %v476
        %v493 = vrsqrt.pop %v477
        %v494 = vrsqrt.pop %v478
        %v495 = vrsqrt.pop %v479
        %v496 = vrsqrt.pop %v480
        %v497 = vrsqrt.pop %v481
        %v498 = vrsqrt.pop %v482
        %v499 = vrsqrt.pop %v483
        %v500 = vrsqrt.pop %v484
        %v501 = vmul.f32 %v373, %v485
        %v502 = vmul.f32 %v374, %v486
        %v503 = vmul.f32 %v375, %v487
        %v504 = vmul.f32 %v376, %v488
        %v505 = vmul.f32 %v377, %v489
        %v506 = vmul.f32 %v378, %v490
        %v507 = vmul.f32 %v379, %v491
        %v508 = vmul.f32 %v380, %v492
        %v509 = vmul.f32 %v381, %v493
        %v510 = vmul.f32 %v382, %v494
        %v511 = vmul.f32 %v383, %v495
        %v512 = vmul.f32 %v384, %v496
        %v513 = vmul.f32 %v385, %v497
        %v514 = vmul.f32 %v386, %v498
        %v515 = vmul.f32 %v387, %v499
        %v516 = vmul.f32 %v388, %v500
        %v517 = vld [vmem:[%s1] sm:$0x1]
        %v519 = vlaneseq
        %v520 = vshrl.u32 %v519, 7
        %v521 = vsub.s32 0, %v520
        %v522 = vrot.slane %v517, %v521
        %v524 = vmul.f32 %v501, %v522
        %v525 = vmul.f32 %v502, %v522
        %v526 = vmul.f32 %v503, %v522
        %v527 = vmul.f32 %v504, %v522
        %v528 = vmul.f32 %v505, %v522
        %v529 = vmul.f32 %v506, %v522
        %v530 = vmul.f32 %v507, %v522
        %v531 = vmul.f32 %v508, %v522
        %v532 = vmul.f32 %v509, %v522
        %v533 = vmul.f32 %v510, %v522
        %v534 = vmul.f32 %v511, %v522
        %v535 = vmul.f32 %v512, %v522
        %v536 = vmul.f32 %v513, %v522
        %v537 = vmul.f32 %v514, %v522
        %v538 = vmul.f32 %v515, %v522
        %v539 = vmul.f32 %v516, %v522
        %v540 = vld [vmem:[%s2] sm:$0x1]
        %v542 = vlaneseq
        %v543 = vshrl.u32 %v542, 7
        %v544 = vsub.s32 0, %v543
        %v545 = vrot.slane %v540, %v544
        %v547 = vadd.f32 %v524, %v545
        %v548 = vadd.f32 %v525, %v545
        %v549 = vadd.f32 %v526, %v545
        %v550 = vadd.f32 %v527, %v545
        %v551 = vadd.f32 %v528, %v545
        %v552 = vadd.f32 %v529, %v545
        %v553 = vadd.f32 %v530, %v545
        %v554 = vadd.f32 %v531, %v545
        %v555 = vadd.f32 %v532, %v545
        %v556 = vadd.f32 %v533, %v545
        %v557 = vadd.f32 %v534, %v545
        %v558 = vadd.f32 %v535, %v545
        %v559 = vadd.f32 %v536, %v545
        %v560 = vadd.f32 %v537, %v545
        %v561 = vadd.f32 %v538, %v545
        %v562 = vadd.f32 %v539, %v545
        %v563 = vpack.c.bf16 %v548, %v547
        %v564 = vpack.c.bf16 %v550, %v549
        %v565 = vpack.c.bf16 %v552, %v551
        %v566 = vpack.c.bf16 %v554, %v553
        %v567 = vpack.c.bf16 %v556, %v555
        %v568 = vpack.c.bf16 %v558, %v557
        %v569 = vpack.c.bf16 %v560, %v559
        %v570 = vpack.c.bf16 %v562, %v561
        %v571 = vld [vmem:[%s285] sm:$0xf]
        %v572 = vld [vmem:[%s285 + $0x4] sm:$0xf]
        %v573 = vld [vmem:[%s285 + $0x8] sm:$0xf]
        %v574 = vld [vmem:[%s285 + $0xc] sm:$0xf]
        %v575 = vld [vmem:[%s288] sm:$0x1]
        %v577 = vlaneseq
        %v578 = vshrl.u32 %v577, 7
        %v579 = vsub.s32 0, %v578
        %v580 = vrot.slane %v575, %v579
        %v586 = vunpack.c.l.b16 %v571
        %v587 = vunpack.c.l.b16 %v572
        %v588 = vunpack.c.l.b16 %v573
        %v589 = vunpack.c.l.b16 %v574
        %v590 = vpack.c.b16 %v587, %v586
        %v591 = vpack.c.b16 %v589, %v588
        %v595 = vsel %vm307, %v563, 0
        %v598 = vsel %vm307, %v564, 0
        %v601 = vsel %vm307, %v565, 0
        %v604 = vsel %vm307, %v566, 0
        %v607 = vsel %vm307, %v567, 0
        %v610 = vsel %vm307, %v568, 0
        %v613 = vsel %vm307, %v569, 0
        %v616 = vsel %vm307, %v570, 0
        %618 = vmatprep.subr.bf16.mxu0 0
        %619 = vmatpush1.bf16.msra.mxu0 %v590
        %620 = vmatprep.subr.bf16.mxu0 0
        %621 = vmatpush1.bf16.msra.mxu0 %v591
        %622 = vmatprep.subr.bf16.mxu0 0
        %623 = vmatpush1.bf16.msra.mxu0 0
        %624 = vmatprep.subr.bf16.mxu0 0
        %625 = vmatpush1.bf16.msra.mxu0 0
        %626 = vmatprep.subr.bf16.mxu0 0
        %627 = vmatpush1.bf16.msra.mxu0 0
        %628 = vmatprep.subr.bf16.mxu0 0
        %629 = vmatpush1.bf16.msra.mxu0 0
        %630 = vmatprep.subr.bf16.mxu0 0
        %631 = vmatpush1.bf16.msra.mxu0 0
        %632 = vmatprep.subr.bf16.mxu0 0
        %633 = vmatpush1.bf16.msra.mxu0 0
        %634 = vmatprep.subr.bf16.mxu0 0
        %635 = vmatpush1.bf16.msra.mxu0 0
        %636 = vmatprep.subr.bf16.mxu0 0
        %637 = vmatpush1.bf16.msra.mxu0 0
        %638 = vmatprep.subr.bf16.mxu0 0
        %639 = vmatpush1.bf16.msra.mxu0 0
        %640 = vmatprep.subr.bf16.mxu0 0
        %641 = vmatpush1.bf16.msra.mxu0 0
        %642 = vmatprep.subr.bf16.mxu0 0
        %643 = vmatpush1.bf16.msra.mxu0 0
        %644 = vmatprep.subr.bf16.mxu0 0
        %645 = vmatpush1.bf16.msra.mxu0 0
        %646 = vmatprep.subr.bf16.mxu0 0
        %647 = vmatpush1.bf16.msra.mxu0 0
        %648 = vmatprep.subr.bf16.mxu0 0
        %649 = vmatpush1.bf16.msra.mxu0 0
        %650 = vmatprep.mubr.bf16.mxu0 0
        %651 = vmatmul.mubr.bf16.gmra.mrb[0].mxu0 %v595
        %v652 = vpop.f32.mrb[0].mxu0
        %v653 = vadd.f32 %v580, %v652
        %v654 = vpop.f32.mrb[0].mxu0
        %v655 = vpop.f32.mrb[0].mxu0
        %v656 = vadd.f32 %v580, %v655
        %v657 = vpop.f32.mrb[0].mxu0
        %658 = vmatprep.mubr.bf16.mxu0 0
        %659 = vmatmul.mubr.bf16.gmra.mrb[0].mxu0 %v598
        %v660 = vpop.f32.mrb[0].mxu0
        %v661 = vadd.f32 %v580, %v660
        %v662 = vpop.f32.mrb[0].mxu0
        %v663 = vpop.f32.mrb[0].mxu0
        %v664 = vadd.f32 %v580, %v663
        %v665 = vpop.f32.mrb[0].mxu0
        %666 = vmatprep.mubr.bf16.mxu0 0
        %667 = vmatmul.mubr.bf16.gmra.mrb[0].mxu0 %v601
        %v668 = vpop.f32.mrb[0].mxu0
        %v669 = vadd.f32 %v580, %v668
        %v670 = vpop.f32.mrb[0].mxu0
        %v671 = vpop.f32.mrb[0].mxu0
        %v672 = vadd.f32 %v580, %v671
        %v673 = vpop.f32.mrb[0].mxu0
        %674 = vmatprep.mubr.bf16.mxu0 0
        %675 = vmatmul.mubr.bf16.gmra.mrb[0].mxu0 %v604
        %v676 = vpop.f32.mrb[0].mxu0
        %v677 = vadd.f32 %v580, %v676
        %v678 = vpop.f32.mrb[0].mxu0
        %v679 = vpop.f32.mrb[0].mxu0
        %v680 = vadd.f32 %v580, %v679
        %v681 = vpop.f32.mrb[0].mxu0
        %682 = vmatprep.mubr.bf16.mxu0 0
        %683 = vmatmul.mubr.bf16.gmra.mrb[0].mxu0 %v607
        %v684 = vpop.f32.mrb[0].mxu0
        %v685 = vadd.f32 %v580, %v684
        %v686 = vpop.f32.mrb[0].mxu0
        %v687 = vpop.f32.mrb[0].mxu0
        %v688 = vadd.f32 %v580, %v687
        %v689 = vpop.f32.mrb[0].mxu0
        %690 = vmatprep.mubr.bf16.mxu0 0
        %691 = vmatmul.mubr.bf16.gmra.mrb[0].mxu0 %v610
        %v692 = vpop.f32.mrb[0].mxu0
        %v693 = vadd.f32 %v580, %v692
        %v694 = vpop.f32.mrb[0].mxu0
        %v695 = vpop.f32.mrb[0].mxu0
        %v696 = vadd.f32 %v580, %v695
        %v697 = vpop.f32.mrb[0].mxu0
        %698 = vmatprep.mubr.bf16.mxu0 0
        %699 = vmatmul.mubr.bf16.gmra.mrb[0].mxu0 %v613
        %v700 = vpop.f32.mrb[0].mxu0
        %v701 = vadd.f32 %v580, %v700
        %v702 = vpop.f32.mrb[0].mxu0
        %v703 = vpop.f32.mrb[0].mxu0
        %v704 = vadd.f32 %v580, %v703
        %v705 = vpop.f32.mrb[0].mxu0
        %706 = vmatprep.mubr.bf16.mxu0 0
        %707 = vmatmul.mubr.bf16.gmra.mrb[0].mxu0 %v616
        %v708 = vpop.f32.mrb[0].mxu0
        %v709 = vadd.f32 %v580, %v708
        %v710 = vpop.f32.mrb[0].mxu0
        %v711 = vpop.f32.mrb[0].mxu0
        %v712 = vadd.f32 %v580, %v711
        %v713 = vpop.f32.mrb[0].mxu0
        %714 = vdwg.mxu0
        %v715 = vmul.f32 %v653, %v653
        %v716 = vmul.f32 %v656, %v656
        %v717 = vmul.f32 %v661, %v661
        %v718 = vmul.f32 %v664, %v664
        %v719 = vmul.f32 %v669, %v669
        %v720 = vmul.f32 %v672, %v672
        %v721 = vmul.f32 %v677, %v677
        %v722 = vmul.f32 %v680, %v680
        %v723 = vmul.f32 %v685, %v685
        %v724 = vmul.f32 %v688, %v688
        %v725 = vmul.f32 %v693, %v693
        %v726 = vmul.f32 %v696, %v696
        %v727 = vmul.f32 %v701, %v701
        %v728 = vmul.f32 %v704, %v704
        %v729 = vmul.f32 %v709, %v709
        %v730 = vmul.f32 %v712, %v712
        %v731 = vmul.f32 %v653, %v715
        %v732 = vmul.f32 %v656, %v716
        %v733 = vmul.f32 %v661, %v717
        %v734 = vmul.f32 %v664, %v718
        %v735 = vmul.f32 %v669, %v719
        %v736 = vmul.f32 %v672, %v720
        %v737 = vmul.f32 %v677, %v721
        %v738 = vmul.f32 %v680, %v722
        %v739 = vmul.f32 %v685, %v723
        %v740 = vmul.f32 %v688, %v724
        %v741 = vmul.f32 %v693, %v725
        %v742 = vmul.f32 %v696, %v726
        %v743 = vmul.f32 %v701, %v727
        %v744 = vmul.f32 %v704, %v728
        %v745 = vmul.f32 %v709, %v729
        %v746 = vmul.f32 %v712, %v730
        %v747 = vmul.f32 %v731, 0.044715
        %v748 = vmul.f32 %v732, 0.044715
        %v749 = vmul.f32 %v733, 0.044715
        %v750 = vmul.f32 %v734, 0.044715
        %v751 = vmul.f32 %v735, 0.044715
        %v752 = vmul.f32 %v736, 0.044715
        %v753 = vmul.f32 %v737, 0.044715
        %v754 = vmul.f32 %v738, 0.044715
        %v755 = vmul.f32 %v739, 0.044715
        %v756 = vmul.f32 %v740, 0.044715
        %v757 = vmul.f32 %v741, 0.044715
        %v758 = vmul.f32 %v742, 0.044715
        %v759 = vmul.f32 %v743, 0.044715
        %v760 = vmul.f32 %v744, 0.044715
        %v761 = vmul.f32 %v745, 0.044715
        %v762 = vmul.f32 %v746, 0.044715
        %v763 = vadd.f32 %v653, %v747
        %v764 = vadd.f32 %v656, %v748
        %v765 = vadd.f32 %v661, %v749
        %v766 = vadd.f32 %v664, %v750
        %v767 = vadd.f32 %v669, %v751
        %v768 = vadd.f32 %v672, %v752
        %v769 = vadd.f32 %v677, %v753
        %v770 = vadd.f32 %v680, %v754
        %v771 = vadd.f32 %v685, %v755
        %v772 = vadd.f32 %v688, %v756
        %v773 = vadd.f32 %v693, %v757
        %v774 = vadd.f32 %v696, %v758
        %v775 = vadd.f32 %v701, %v759
        %v776 = vadd.f32 %v704, %v760
        %v777 = vadd.f32 %v709, %v761
        %v778 = vadd.f32 %v712, %v762
        %v779 = vmul.f32 %v763, 0.7978846
        %v780 = vmul.f32 %v764, 0.7978846
        %v781 = vmul.f32 %v765, 0.7978846
        %v782 = vmul.f32 %v766, 0.7978846
        %v783 = vmul.f32 %v767, 0.7978846
        %v784 = vmul.f32 %v768, 0.7978846
        %v785 = vmul.f32 %v769, 0.7978846
        %v786 = vmul.f32 %v770, 0.7978846
        %v787 = vmul.f32 %v771, 0.7978846
        %v788 = vmul.f32 %v772, 0.7978846
        %v789 = vmul.f32 %v773, 0.7978846
        %v790 = vmul.f32 %v774, 0.7978846
        %v791 = vmul.f32 %v775, 0.7978846
        %v792 = vmul.f32 %v776, 0.7978846
        %v793 = vmul.f32 %v777, 0.7978846
        %v794 = vmul.f32 %v778, 0.7978846
        %v795 = vtanh.pop %v779
        %v796 = vtanh.pop %v780
        %v797 = vtanh.pop %v781
        %v798 = vtanh.pop %v782
        %v799 = vtanh.pop %v783
        %v800 = vtanh.pop %v784
        %v801 = vtanh.pop %v785
        %v802 = vtanh.pop %v786
        %v803 = vtanh.pop %v787
        %v804 = vtanh.pop %v788
        %v805 = vtanh.pop %v789
        %v806 = vtanh.pop %v790
        %v807 = vtanh.pop %v791
        %v808 = vtanh.pop %v792
        %v809 = vtanh.pop %v793
        %v810 = vtanh.pop %v794
        %v811 = vadd.f32 %v795, 1.0
        %v812 = vadd.f32 %v796, 1.0
        %v813 = vadd.f32 %v797, 1.0
        %v814 = vadd.f32 %v798, 1.0
        %v815 = vadd.f32 %v799, 1.0
        %v816 = vadd.f32 %v800, 1.0
        %v817 = vadd.f32 %v801, 1.0
        %v818 = vadd.f32 %v802, 1.0
        %v819 = vadd.f32 %v803, 1.0
        %v820 = vadd.f32 %v804, 1.0
        %v821 = vadd.f32 %v805, 1.0
        %v822 = vadd.f32 %v806, 1.0
        %v823 = vadd.f32 %v807, 1.0
        %v824 = vadd.f32 %v808, 1.0
        %v825 = vadd.f32 %v809, 1.0
        %v826 = vadd.f32 %v810, 1.0
        %v827 = vmul.f32 %v811, 0.5
        %v828 = vmul.f32 %v812, 0.5
        %v829 = vmul.f32 %v813, 0.5
        %v830 = vmul.f32 %v814, 0.5
        %v831 = vmul.f32 %v815, 0.5
        %v832 = vmul.f32 %v816, 0.5
        %v833 = vmul.f32 %v817, 0.5
        %v834 = vmul.f32 %v818, 0.5
        %v835 = vmul.f32 %v819, 0.5
        %v836 = vmul.f32 %v820, 0.5
        %v837 = vmul.f32 %v821, 0.5
        %v838 = vmul.f32 %v822, 0.5
        %v839 = vmul.f32 %v823, 0.5
        %v840 = vmul.f32 %v824, 0.5
        %v841 = vmul.f32 %v825, 0.5
        %v842 = vmul.f32 %v826, 0.5
        %v843 = vmul.f32 %v653, %v827
        %v844 = vmul.f32 %v656, %v828
        %v845 = vmul.f32 %v661, %v829
        %v846 = vmul.f32 %v664, %v830
        %v847 = vmul.f32 %v669, %v831
        %v848 = vmul.f32 %v672, %v832
        %v849 = vmul.f32 %v677, %v833
        %v850 = vmul.f32 %v680, %v834
        %v851 = vmul.f32 %v685, %v835
        %v852 = vmul.f32 %v688, %v836
        %v853 = vmul.f32 %v693, %v837
        %v854 = vmul.f32 %v696, %v838
        %v855 = vmul.f32 %v701, %v839
        %v856 = vmul.f32 %v704, %v840
        %v857 = vmul.f32 %v709, %v841
        %v858 = vmul.f32 %v712, %v842
        %859 = vst [vmem:[%s280] sm:$0xff] %v843
        %860 = vst [vmem:[%s280 + $0x8] sm:$0xff] %v844
        %861 = vst [vmem:[%s280 + $0x10] sm:$0xff] %v845
        %862 = vst [vmem:[%s280 + $0x18] sm:$0xff] %v846
        %863 = vst [vmem:[%s280 + $0x20] sm:$0xff] %v847
        %864 = vst [vmem:[%s280 + $0x28] sm:$0xff] %v848
        %865 = vst [vmem:[%s280 + $0x30] sm:$0xff] %v849
        %866 = vst [vmem:[%s280 + $0x38] sm:$0xff] %v850
        %867 = vst [vmem:[%s280 + $0x40] sm:$0xff] %v851
        %868 = vst [vmem:[%s280 + $0x48] sm:$0xff] %v852
        %869 = vst [vmem:[%s280 + $0x50] sm:$0xff] %v853
        %870 = vst [vmem:[%s280 + $0x58] sm:$0xff] %v854
        %871 = vst [vmem:[%s280 + $0x60] sm:$0xff] %v855
        %872 = vst [vmem:[%s280 + $0x68] sm:$0xff] %v856
        %873 = vst [vmem:[%s280 + $0x70] sm:$0xff] %v857
        %874 = vst [vmem:[%s280 + $0x78] sm:$0xff] %v858
        %s875 = sand.u32 %s164, 1
        %s876 = scalar_lea.sflag [#allocation4], %s875
        %s877 = sand.u32 %s164, 1
        %s878 = smul.addr %s877, 128
        %s879 = scalar_lea.vmem [#allocation5], %s878
        // Predicated region
        $region45: #{_lambda_.1} parent=39 // pred_check
          %p880 = pneg %p174
        $region46: #{_lambda_.1} parent=39 // pred_check_branch
          %882 = sbr.rel (%p880) target = $region48
        $region47: #{_lambda_.1} parent=39 // pred_region
          %s883 = smul.u32 16, %s26
          %s885 = ssub.s32 2048, 2048
          %886 = vsyncadd %s876, %s885
          %s887 = sadd.s32 %s27, %s883
          %s888 = smul.addr %s887, 128
          %s889 = scalar_lea.hbm %s5, %s888
          %s890 = sshll.u32 %s879, 4
          %s891 = int_to_ptr.vmem [resolvable:$true] %s890
          %896 = dma.vmem_to_hbm [thread:$0]  %s891, 2048, %s889, %s876, 128, 128, 8
        $region48: #{_lambda_.1} parent=39 // pred_fallthru
          _
      $region40: #{_lambda_.1} parent=5 // pred_fallthru
        _
      %p897 = scmp.le.s32.totalorder 2, %s17
      // Predicated region
      $region49: #{_lambda_.1} parent=5 // pred_check
        %p898 = pneg %p897
      $region50: #{_lambda_.1} parent=5 // pred_check_branch
        %900 = sbr.rel (%p898) target = $region52
      $region51: #{_lambda_.1} parent=5 // pred_region
        %s901 = ssub.s32 %s17, 2
        // Predicated region
        $region53: #{_lambda_.1} parent=51 // pred_check
          %p902 = pneg %p180
        $region54: #{_lambda_.1} parent=51 // pred_check_branch
          %904 = sbr.rel (%p902) target = $region56
        $region55: #{_lambda_.1} parent=51 // pred_region
          %s905 = sand.u32 %s165, 1
          %s906 = scalar_lea.sflag [#allocation4], %s905
          %s907 = sand.u32 %s165, 1
          %s908 = smul.addr %s907, 128
          %s909 = scalar_lea.vmem [#allocation5], %s908
          %910 = dma.done %s906, 2048
        $region56: #{_lambda_.1} parent=51 // pred_fallthru
          _
      $region52: #{_lambda_.1} parent=5 // pred_fallthru
        _
    $region6: #{_lambda_.1} parent=1 // loop_footer
      %s21 = sadd.s32 1, %s17
    $region7: #{_lambda_.1} parent=1 // loop_footer_branch
      %16 = sbr.rel target = $region3
    $region8: #{_lambda_.1} parent=1 // loop_exit
      _
    %911 = vsyncpa [#allocation3], 1
    %s912 = scalar_lea.sflag [#allocation3], 1
    %913 = vsyncpa %s912, 1
    %914 = vsyncpa [#allocation4], 1
    %s915 = scalar_lea.sflag [#allocation4], 1
    %916 = vsyncpa %s915, 1

</llo_original>
